<compile_context>
chip_gen: v7x
topology: tpu7x:2x2x1
jax: 0.10.0
libtpu: 0.0.40
codegen_flags: <defaults>
</compile_context>

<pallas_src>
import jax
import jax.numpy as jnp
from jax.experimental import pallas as pl
from jax.experimental.pallas import tpu as pltpu


def _round_up(x, m):
    return ((x + m - 1) // m) * m


def _intermediate_kernel(x_ref, w_ref, b_ref, o_ref, acc_ref):
    # grid = (N_tiles, M_tiles, K_tiles); K (axis 2) is the reduction axis.
    k = pl.program_id(2)

    @pl.when(k == 0)
    def _():
        acc_ref[...] = jnp.zeros_like(acc_ref)

    acc_ref[...] += jnp.dot(
        x_ref[...], w_ref[...], preferred_element_type=jnp.float32
    )

    @pl.when(k == pl.num_programs(2) - 1)
    def _():
        acc = acc_ref[...] + b_ref[...].astype(jnp.float32)  # bias broadcast over rows
        o_ref[...] = jnp.maximum(acc, 0.0).astype(o_ref.dtype)  # fused ReLU + cast


def intermediate_forward(hidden_states, weight, bias, *, tm=256, tn=512, tk=512):
    """relu(hidden_states @ weight + bias).

    hidden_states: [..., H]; weight: [H, I] (transpose of PyTorch's [I, H]); bias: [I].
    """
    orig_shape = hidden_states.shape
    H = orig_shape[-1]
    I = weight.shape[1]
    out_dtype = hidden_states.dtype

    x2d = hidden_states.reshape(-1, H)
    M = x2d.shape[0]

    # Effective tile sizes: shrink for tiny problems, keep (8, 128) alignment.
    tm_e = min(tm, _round_up(M, 8))
    tn_e = min(tn, _round_up(I, 128))
    tk_e = min(tk, _round_up(H, 128))

    Mp = _round_up(M, tm_e)
    Ip = _round_up(I, tn_e)
    Hp = _round_up(H, tk_e)

    # Zero-pad to tile multiples (zeros are inert in the GEMM; padded output
    # columns/rows are sliced off afterwards). Keeps output stores lane-dense.
    if (Mp, Hp) != (M, H):
        x2d = jnp.pad(x2d, ((0, Mp - M), (0, Hp - H)))
    w_p = weight
    if (Hp, Ip) != (H, I):
        w_p = jnp.pad(weight, ((0, Hp - H), (0, Ip - I)))
    b_p = bias if Ip == I else jnp.pad(bias, (0, Ip - I))
    b2d = b_p.reshape(1, Ip)

    # N outer, M inner (W tile resident across inner loop), K innermost reduction.
    grid = (Ip // tn_e, Mp // tm_e, Hp // tk_e)

    in_bytes = jnp.dtype(x2d.dtype).itemsize
    out_bytes = jnp.dtype(out_dtype).itemsize
    # Double-buffered per-step VMEM footprint + f32 accumulator scratch.
    footprint = (
        2 * (tm_e * tk_e + tk_e * tn_e + tn_e) * in_bytes
        + 2 * tm_e * tn_e * out_bytes
        + tm_e * tn_e * 4
    )
    vmem_limit = int(min(100 * 2**20, max(32 * 2**20, 2 * footprint)))

    cost = pl.CostEstimate(
        flops=2 * Mp * Hp * Ip,
        transcendentals=0,
        bytes_accessed=(Mp * Hp + Hp * Ip + Ip) * in_bytes + Mp * Ip * out_bytes,
    )

    out2d = pl.pallas_call(
        _intermediate_kernel,
        out_shape=jax.ShapeDtypeStruct((Mp, Ip), out_dtype),
        grid=grid,
        in_specs=[
            pl.BlockSpec((tm_e, tk_e), lambda j, i, k: (i, k)),  # X tile
            pl.BlockSpec((tk_e, tn_e), lambda j, i, k: (k, j)),  # W tile (reused over M)
            pl.BlockSpec((1, tn_e), lambda j, i, k: (0, j)),     # bias tile (reused over M, K)
        ],
        out_specs=pl.BlockSpec((tm_e, tn_e), lambda j, i, k: (i, j)),
        scratch_shapes=[pltpu.VMEM((tm_e, tn_e), jnp.float32)],
        compiler_params=pltpu.CompilerParams(
            dimension_semantics=("parallel", "parallel", "arbitrary"),
            vmem_limit_bytes=vmem_limit,
        ),
        cost_estimate=cost,
    )(x2d, w_p, b2d)

    out2d = out2d[:M, :I]
    return out2d.reshape(*orig_shape[:-1], I)


if __name__ == "__main__":
    # Small shapes consistent with the module's forward.
    batch, seq, hidden_size, intermediate_size = 2, 8, 32, 64

    key = jax.random.PRNGKey(0)
    kx, kw, kb = jax.random.split(key, 3)

    x = jax.random.normal(kx, (batch, seq, hidden_size), dtype=jnp.float32)
    # Linear(hidden_size, intermediate_size) params, stored as [H, I]
    # (transpose of PyTorch's [out, in] weight).
    bound = 1.0 / (hidden_size ** 0.5)
    weight = jax.random.uniform(
        kw, (hidden_size, intermediate_size), dtype=jnp.float32,
        minval=-bound, maxval=bound)
    bias = jax.random.uniform(
        kb, (intermediate_size,), dtype=jnp.float32,
        minval=-bound, maxval=bound)

    fwd = jax.jit(intermediate_forward)
    out = fwd(x, weight, bias)
    jax.block_until_ready(out)

    # Sanity check against a pure-JAX reference.
    ref = jnp.maximum(jnp.einsum("bsh,hi->bsi", x, weight) + bias, 0.0)
    assert out.shape == (batch, seq, intermediate_size)
    assert jnp.allclose(out, ref, atol=1e-5, rtol=1e-5)

    # Exercise a larger, tile-aligned shape to confirm the tiled path (multiple
    # grid steps, resident weight tile, K accumulation) is numerically correct.
    M2, H2, I2 = 512, 1024, 1536
    x2 = jax.random.normal(jax.random.PRNGKey(1), (M2, H2), dtype=jnp.float32)
    w2 = jax.random.normal(jax.random.PRNGKey(2), (H2, I2), dtype=jnp.float32) * 0.02
    b2 = jax.random.normal(jax.random.PRNGKey(3), (I2,), dtype=jnp.float32) * 0.02
    out2 = jax.jit(intermediate_forward)(x2, w2, b2)
    jax.block_until_ready(out2)
    ref2 = jnp.maximum(x2 @ w2 + b2, 0.0)
    assert jnp.allclose(out2, ref2, atol=1e-3, rtol=1e-3)

    print("KERNEL_OK")
</pallas_src>

<mosaic_0001>
module attributes {stable_mosaic.version = 11 : i64} {
  func.func @_intermediate_kernel(%arg0: i32, %arg1: i32, %arg2: i32, %arg3: memref<16x128xf32, #tpu.memory_space<vmem>>, %arg4: memref<128x128xf32, #tpu.memory_space<vmem>>, %arg5: memref<1x128xf32, #tpu.memory_space<vmem>>, %arg6: memref<16x128xf32, #tpu.memory_space<vmem>>, %arg7: memref<16x128xf32, #tpu.memory_space<vmem>>) attributes {dimension_semantics = [#tpu.dimension_semantics<parallel>, #tpu.dimension_semantics<parallel>, #tpu.dimension_semantics<arbitrary>], iteration_bounds = array<i64: 1, 1, 1>, scalar_prefetch = 0 : i64, scratch_operands = 1 : i64, tpu.core_type = #tpu.core_type<tc>, window_params = [{transform_indices = @transform_0, window_bounds = array<i64: 16, 128>}, {transform_indices = @transform_1, window_bounds = array<i64: 128, 128>}, {transform_indices = @transform_2, window_bounds = array<i64: 1, 128>}, {transform_indices = @transform_3, window_bounds = array<i64: 16, 128>}]} {
    %c0_i32 = arith.constant 0 : i32
    %0 = arith.cmpi eq, %arg2, %c0_i32 : i32
    %1 = arith.extui %0 : i1 to i32
    %c0_i32_0 = arith.constant 0 : i32
    %2 = arith.cmpi ne, %1, %c0_i32_0 : i32
    scf.if %2 {
      %cst_10 = arith.constant 0.000000e+00 : f32
      %12 = vector.broadcast %cst_10 : f32 to vector<16x128xf32>
      %c0_11 = arith.constant 0 : index
      %c0_12 = arith.constant 0 : index
      %13 = vector.load %arg7[%c0_11, %c0_12] : memref<16x128xf32, #tpu.memory_space<vmem>>, vector<16x128xf32>
      tpu.vector_store %arg7[%c0_11, %c0_12], %12 {strides = array<i32>} : memref<16x128xf32, #tpu.memory_space<vmem>>, vector<16x128xf32>,
    } else {
    }
    %c0 = arith.constant 0 : index
    %c0_1 = arith.constant 0 : index
    %3 = vector.load %arg7[%c0, %c0_1] : memref<16x128xf32, #tpu.memory_space<vmem>>, vector<16x128xf32>
    %c0_2 = arith.constant 0 : index
    %c0_3 = arith.constant 0 : index
    %4 = vector.load %arg3[%c0_2, %c0_3] : memref<16x128xf32, #tpu.memory_space<vmem>>, vector<16x128xf32>
    %c0_4 = arith.constant 0 : index
    %c0_5 = arith.constant 0 : index
    %5 = vector.load %arg4[%c0_4, %c0_5] : memref<128x128xf32, #tpu.memory_space<vmem>>, vector<128x128xf32>
    %cst = arith.constant dense<0.000000e+00> : vector<16x128xf32>
    %6 = tpu.matmul %4, %5, %cst {dimension_numbers = #tpu.dot_dimension_numbers<[1], [0], [0], [1], [0, 0, 1, 1], [], []>} : vector<16x128xf32>, vector<128x128xf32>, vector<16x128xf32> -> vector<16x128xf32>
    %7 = arith.addf %3, %6 : vector<16x128xf32>
    %c0_6 = arith.constant 0 : index
    %c0_7 = arith.constant 0 : index
    %8 = vector.load %arg7[%c0_6, %c0_7] : memref<16x128xf32, #tpu.memory_space<vmem>>, vector<16x128xf32>
    tpu.vector_store %arg7[%c0_6, %c0_7], %7 {strides = array<i32>} : memref<16x128xf32, #tpu.memory_space<vmem>>, vector<16x128xf32>,
    %c0_i32_8 = arith.constant 0 : i32
    %9 = arith.cmpi eq, %arg2, %c0_i32_8 : i32
    %10 = arith.extui %9 : i1 to i32
    %c0_i32_9 = arith.constant 0 : i32
    %11 = arith.cmpi ne, %10, %c0_i32_9 : i32
    scf.if %11 {
      %c0_10 = arith.constant 0 : index
      %c0_11 = arith.constant 0 : index
      %12 = vector.load %arg7[%c0_10, %c0_11] : memref<16x128xf32, #tpu.memory_space<vmem>>, vector<16x128xf32>
      %c0_12 = arith.constant 0 : index
      %c0_13 = arith.constant 0 : index
      %13 = vector.load %arg5[%c0_12, %c0_13] : memref<1x128xf32, #tpu.memory_space<vmem>>, vector<1x128xf32>
      %14 = vector.broadcast %13 : vector<1x128xf32> to vector<16x128xf32>
      %15 = arith.addf %12, %14 : vector<16x128xf32>
      %cst_14 = arith.constant 0.000000e+00 : f32
      %16 = vector.broadcast %cst_14 : f32 to vector<16x128xf32>
      %17 = arith.maximumf %15, %16 : vector<16x128xf32>
      %c0_15 = arith.constant 0 : index
      %c0_16 = arith.constant 0 : index
      %18 = vector.load %arg6[%c0_15, %c0_16] : memref<16x128xf32, #tpu.memory_space<vmem>>, vector<16x128xf32>
      tpu.vector_store %arg6[%c0_15, %c0_16], %17 {strides = array<i32>} : memref<16x128xf32, #tpu.memory_space<vmem>>, vector<16x128xf32>,
    } else {
    }
    return
  }
  func.func @transform_0(%arg0: i32, %arg1: i32, %arg2: i32) -> (i32, i32) {
    %c0_i32 = arith.constant 0 : i32
    return %arg1, %arg2 : i32, i32
  }
  func.func @transform_1(%arg0: i32, %arg1: i32, %arg2: i32) -> (i32, i32) {
    %c0_i32 = arith.constant 0 : i32
    return %arg2, %arg0 : i32, i32
  }
  func.func @transform_2(%arg0: i32, %arg1: i32, %arg2: i32) -> (i32, i32) {
    %c0_i32 = arith.constant 0 : i32
    %c0_i32_0 = arith.constant 0 : i32
    return %c0_i32, %arg0 : i32, i32
  }
  func.func @transform_3(%arg0: i32, %arg1: i32, %arg2: i32) -> (i32, i32) {
    %c0_i32 = arith.constant 0 : i32
    return %arg1, %arg0 : i32, i32
  }
}

</mosaic_0001>

<llo_original>
// kernel: intermediate_forward.1
$region0: #{intermediate_forward.1}
  #allocation0 [shape = 'u32[]', space=smem, size = 0x4, offset = 0x4, fixed_abs, tag = 'smem constant byte address 0x4 - core index']
  #allocation1 [shape = 'u32[144,128]{1,0:T(1,128)}', space=vmem, size = 0x12000, scoped, tag = 'internal scratch']
  #allocation2 [shape = 'f32[16,128]{1,0:T(8,128)}', space=vmem, size = 0x2000, scoped, tag = 'scratch operand']
  %s0 = inlined_call_operand.vmem [shape: f32[16,128], index: 0, kind: input, shape index: {}]
  %s1 = inlined_call_operand.vmem [shape: f32[128,128], index: 1, kind: input, shape index: {}]
  %s2 = inlined_call_operand.vmem [shape: f32[1,128], index: 2, kind: input, shape index: {}]
  %s3 = inlined_call_operand.vmem [shape: f32[16,128], index: 3, kind: output, shape index: {}]
  %s4 = sld [smem:[#allocation0]]
  $region30: #{intermediate_forward.1} parent=0
    _
  %s6 = ssub.s32 1, %s4
  %s7 = scalar_select 0, %s6, %s4
  // Predicated region
  $region2: #{intermediate_forward.1} parent=0 // pred_check
    _
  $region3: #{intermediate_forward.1} parent=0 // pred_check_branch
    %9 = sbr.rel (0) target = $region5
  $region4: #{intermediate_forward.1} parent=0 // pred_region
    _
  $region5: #{intermediate_forward.1} parent=0 // pred_fallthru
    _
  // Predicated region
  $region6: #{intermediate_forward.1} parent=0 // pred_check
    _
  $region7: #{intermediate_forward.1} parent=0 // pred_check_branch
    %11 = sbr.rel (0) target = $region9
  $region8: #{intermediate_forward.1} parent=0 // pred_region
    _
  $region9: #{intermediate_forward.1} parent=0 // pred_fallthru
    _
  // Predicated region
  $region10: #{intermediate_forward.1} parent=0 // pred_check
    _
  $region11: #{intermediate_forward.1} parent=0 // pred_check_branch
    %13 = sbr.rel (0) target = $region13
  $region12: #{intermediate_forward.1} parent=0 // pred_region
    _
  $region13: #{intermediate_forward.1} parent=0 // pred_fallthru
    _
  %p14 = scmp.eq.s32.totalorder 0, 0
  // Predicated region
  $region14: #{intermediate_forward.1} parent=0 // pred_check
    %p15 = pneg %p14
  $region15: #{intermediate_forward.1} parent=0 // pred_check_branch
    %17 = sbr.rel (%p15) target = $region17
  $region16: #{intermediate_forward.1} parent=0 // pred_region
    %18 = vst [vmem:[#allocation2] sm:$0xff] 0.0
    %19 = vst [vmem:[#allocation2 + $0x8] sm:$0xff] 0.0
  $region17: #{intermediate_forward.1} parent=0 // pred_fallthru
    _
  %v20 = vld [vmem:[#allocation2] sm:$0xff]
  %v21 = vld [vmem:[#allocation2 + $0x8] sm:$0xff]
  %v22 = vld [vmem:[%s0] sm:$0xff]
  %v23 = vld [vmem:[%s0 + $0x8] sm:$0xff]
  %v24 = vld [vmem:[%s1] sm:$0xff]
  %v25 = vld [vmem:[%s1 + $0x8] sm:$0xff]
  %v26 = vld [vmem:[%s1 + $0x10] sm:$0xff]
  %v27 = vld [vmem:[%s1 + $0x18] sm:$0xff]
  %v28 = vld [vmem:[%s1 + $0x20] sm:$0xff]
  %v29 = vld [vmem:[%s1 + $0x28] sm:$0xff]
  %v30 = vld [vmem:[%s1 + $0x30] sm:$0xff]
  %v31 = vld [vmem:[%s1 + $0x38] sm:$0xff]
  %v32 = vld [vmem:[%s1 + $0x40] sm:$0xff]
  %v33 = vld [vmem:[%s1 + $0x48] sm:$0xff]
  %v34 = vld [vmem:[%s1 + $0x50] sm:$0xff]
  %v35 = vld [vmem:[%s1 + $0x58] sm:$0xff]
  %v36 = vld [vmem:[%s1 + $0x60] sm:$0xff]
  %v37 = vld [vmem:[%s1 + $0x68] sm:$0xff]
  %v38 = vld [vmem:[%s1 + $0x70] sm:$0xff]
  %v39 = vld [vmem:[%s1 + $0x78] sm:$0xff]
  %40 = vmatprep.subr.mxu0 0.0
  %41 = vmatpush1.msra.mxu0 %v24
  %42 = vmatprep.subr.mxu0 0.0
  %43 = vmatpush1.msra.mxu0 %v25
  %44 = vmatprep.subr.mxu0 0.0
  %45 = vmatpush1.msra.mxu0 %v26
  %46 = vmatprep.subr.mxu0 0.0
  %47 = vmatpush1.msra.mxu0 %v27
  %48 = vmatprep.subr.mxu0 0.0
  %49 = vmatpush1.msra.mxu0 %v28
  %50 = vmatprep.subr.mxu0 0.0
  %51 = vmatpush1.msra.mxu0 %v29
  %52 = vmatprep.subr.mxu0 0.0
  %53 = vmatpush1.msra.mxu0 %v30
  %54 = vmatprep.subr.mxu0 0.0
  %55 = vmatpush1.msra.mxu0 %v31
  %56 = vmatprep.subr.mxu0 0.0
  %57 = vmatpush1.msra.mxu0 %v32
  %58 = vmatprep.subr.mxu0 0.0
  %59 = vmatpush1.msra.mxu0 %v33
  %60 = vmatprep.subr.mxu0 0.0
  %61 = vmatpush1.msra.mxu0 %v34
  %62 = vmatprep.subr.mxu0 0.0
  %63 = vmatpush1.msra.mxu0 %v35
  %64 = vmatprep.subr.mxu0 0.0
  %65 = vmatpush1.msra.mxu0 %v36
  %66 = vmatprep.subr.mxu0 0.0
  %67 = vmatpush1.msra.mxu0 %v37
  %68 = vmatprep.subr.mxu0 0.0
  %69 = vmatpush1.msra.mxu0 %v38
  %70 = vmatprep.subr.mxu0 0.0
  %71 = vmatpush1.msra.mxu0 %v39
  %72 = vmatprep.subr.mxu0 0.0
  %73 = vmatpush1.msra.mxu0 0.0
  %74 = vmatprep.subr.mxu0 0.0
  %75 = vmatpush1.msra.mxu0 0.0
  %76 = vmatprep.subr.mxu0 0.0
  %77 = vmatpush1.msra.mxu0 0.0
  %78 = vmatprep.subr.mxu0 0.0
  %79 = vmatpush1.msra.mxu0 0.0
  %80 = vmatprep.subr.mxu0 0.0
  %81 = vmatpush1.msra.mxu0 0.0
  %82 = vmatprep.subr.mxu0 0.0
  %83 = vmatpush1.msra.mxu0 0.0
  %84 = vmatprep.subr.mxu0 0.0
  %85 = vmatpush1.msra.mxu0 0.0
  %86 = vmatprep.subr.mxu0 0.0
  %87 = vmatpush1.msra.mxu0 0.0
  %88 = vmatprep.subr.mxu0 0.0
  %89 = vmatpush1.msra.mxu0 0.0
  %90 = vmatprep.subr.mxu0 0.0
  %91 = vmatpush1.msra.mxu0 0.0
  %92 = vmatprep.subr.mxu0 0.0
  %93 = vmatpush1.msra.mxu0 0.0
  %94 = vmatprep.subr.mxu0 0.0
  %95 = vmatpush1.msra.mxu0 0.0
  %96 = vmatprep.subr.mxu0 0.0
  %97 = vmatpush1.msra.mxu0 0.0
  %98 = vmatprep.subr.mxu0 0.0
  %99 = vmatpush1.msra.mxu0 0.0
  %100 = vmatprep.subr.mxu0 0.0
  %101 = vmatpush1.msra.mxu0 0.0
  %102 = vmatprep.subr.mxu0 0.0
  %103 = vmatpush1.msra.mxu0 0.0
  %104 = vmatprep.mubr.f32.mxu0 0.0
  %105 = vmatmul.mubr.f32.gmra.mrb[0].mxu0 %v22
  %v106 = vpop.f32.mrb[0].mxu0
  %v107 = vadd.f32 0.0, %v106
  %v108 = vpop.f32.mrb[0].mxu0
  %109 = vmatprep.mubr.f32.mxu0 0.0
  %110 = vmatmul.mubr.f32.gmra.mrb[0].mxu0 %v23
  %v111 = vpop.f32.mrb[0].mxu0
  %v112 = vadd.f32 0.0, %v111
  %v113 = vpop.f32.mrb[0].mxu0
  %114 = vdwg.mxu0
  %v115 = vadd.f32 %v20, %v107
  %v116 = vadd.f32 %v21, %v112
  %117 = vst [vmem:[#allocation2] sm:$0xff] %v115
  %118 = vst [vmem:[#allocation2 + $0x8] sm:$0xff] %v116
  // Predicated region
  $region18: #{intermediate_forward.1} parent=0 // pred_check
    %p119 = pneg %p14
  $region19: #{intermediate_forward.1} parent=0 // pred_check_branch
    %121 = sbr.rel (%p119) target = $region21
  $region20: #{intermediate_forward.1} parent=0 // pred_region
    %v122 = vld [vmem:[#allocation2] sm:$0xff]
    %v123 = vld [vmem:[#allocation2 + $0x8] sm:$0xff]
    %v124 = vld [vmem:[%s2] sm:$0x1]
    %v126 = vlaneseq
    %v127 = vshrl.u32 %v126, 7
    %v128 = vsub.s32 0, %v127
    %v129 = vrot.slane %v124, %v128
    %v131 = vadd.f32 %v122, %v129
    %v132 = vadd.f32 %v123, %v129
    %v133 = vmax.f32 %v131, 0.0
    %v134 = vmax.f32 %v132, 0.0
    %135 = vst [vmem:[%s3] sm:$0xff] %v133
    %136 = vst [vmem:[%s3 + $0x8] sm:$0xff] %v134
  $region21: #{intermediate_forward.1} parent=0 // pred_fallthru
    _
  // Predicated region
  $region22: #{intermediate_forward.1} parent=0 // pred_check
    _
  $region23: #{intermediate_forward.1} parent=0 // pred_check_branch
    %138 = sbr.rel (0) target = $region25
  $region24: #{intermediate_forward.1} parent=0 // pred_region
    _
  $region25: #{intermediate_forward.1} parent=0 // pred_fallthru
    _
  // Predicated region
  $region26: #{intermediate_forward.1} parent=0 // pred_check
    _
  $region27: #{intermediate_forward.1} parent=0 // pred_check_branch
    %140 = sbr.rel (0) target = $region29
  $region28: #{intermediate_forward.1} parent=0 // pred_region
    _
  $region29: #{intermediate_forward.1} parent=0 // pred_fallthru
    _

</llo_original>
